<compile_context>
chip_gen: v5e
topology: v5e:2x2
jax: 0.10.0
libtpu: 0.0.40
codegen_flags: <defaults>
</compile_context>

<pallas_src>
import jax
import jax.numpy as jnp
from jax.experimental import pallas as pl
from jax.experimental.pallas import tpu as pltpu

_LANE_CANDIDATES = (4096, 2048, 1024, 512, 256, 128)
_MiB = 1024 * 1024
_MIN_SPLIT_BLOCK_BYTES = 2 * _MiB   # never shrink blocks below ~2 MiB when splitting for megacore
_VMEM_HEADROOM = 4 * _MiB


def _softplus_kernel(x_ref, o_ref):
    # Exact semantics of the reference CUDA kernel: log(1 + exp(x)).
    # Compute in f32 (free: kernel is HBM-bound) and cast back to the I/O dtype.
    x = x_ref[...].astype(jnp.float32)
    o_ref[...] = jnp.log(1.0 + jnp.exp(x)).astype(o_ref.dtype)


def _vmem_ceiling_bytes() -> int:
    # Generation-aware scoped-VMEM ceiling: ~half of physical VMEM, capped at 48 MiB.
    # v5e/v6e (128 MiB) -> 48 MiB; v7x (64 MiB) -> 32 MiB. Fallback: 32 MiB (safe everywhere).
    default = 32 * _MiB
    try:
        cap = getattr(pltpu.get_tpu_info(), "vmem_capacity_bytes", None)
        if cap:
            return int(max(16 * _MiB, min(int(cap) // 2, 48 * _MiB)))
    except Exception:
        pass
    return default


def _desired_min_steps(total_bytes: int) -> int:
    # Keep the (single, "parallel") grid axis long enough to shard across both
    # v7x TensorCores, but only when the resulting blocks stay >= ~2 MiB so the
    # extra per-step overhead stays negligible on single-TC chips.
    return int(min(4, max(1, total_bytes // _MIN_SPLIT_BLOCK_BYTES)))


def softplus_pallas(x: jax.Array) -> jax.Array:
    orig_shape = x.shape
    dtype = x.dtype
    n = x.size
    if n == 0:
        return x

    itemsize = jnp.dtype(dtype).itemsize
    total_bytes = n * itemsize
    vmem_ceiling = _vmem_ceiling_bytes()
    # Per-buffer block size target; 4 buffers (in+out, double-buffered) + headroom must fit.
    target_block_bytes = min(8 * _MiB, max(_MiB, (vmem_ceiling - _VMEM_HEADROOM) // 4))

    cost = pl.CostEstimate(flops=n, transcendentals=2 * n, bytes_accessed=2 * total_bytes)
    x_flat = jnp.ravel(x)

    if n % 128 == 0:
        # ---------- aligned path: lane-dense 2-D layout, zero wrapper copies ----------
        lane = next(w for w in _LANE_CANDIDATES if n % w == 0)
        rows = n // lane
        x2d = x_flat.reshape(rows, lane)
        row_bytes = lane * itemsize

        if rows >= 8:
            block_rows = min(rows, max(8, (target_block_bytes // row_bytes // 8) * 8))
            steps = _desired_min_steps(total_bytes)
            if steps > 1:
                cap = max(8, (pl.cdiv(rows, steps) // 8) * 8)
                block_rows = min(block_rows, cap)
            # Prefer a divisor of rows -> no masked partial final block.
            if rows % block_rows != 0:
                for cand in range(block_rows, max(8, block_rows // 2) - 1, -8):
                    if rows % cand == 0:
                        block_rows = cand
                        break
        else:
            block_rows = rows  # full-extent block along rows (allowed when < 8)

        grid = (pl.cdiv(rows, block_rows),)
        block_bytes = block_rows * row_bytes
        vmem_limit = int(min(vmem_ceiling, max(16 * _MiB, 4 * block_bytes + _VMEM_HEADROOM)))

        out2d = pl.pallas_call(
            _softplus_kernel,
            out_shape=jax.ShapeDtypeStruct((rows, lane), dtype),
            grid=grid,
            in_specs=[pl.BlockSpec((block_rows, lane), lambda i: (i, 0))],
            out_specs=pl.BlockSpec((block_rows, lane), lambda i: (i, 0)),
            compiler_params=pltpu.CompilerParams(
                dimension_semantics=("parallel",),
                vmem_limit_bytes=vmem_limit,
            ),
            cost_estimate=cost,
        )(x2d)
        return out2d.reshape(orig_shape)

    # ---------- ragged path: 1-D kernel directly over the flat array ----------
    # No jnp.pad / trailing slice: Pallas masks only the partial final block.
    if n <= 1024:
        block = n  # single full-extent block
    else:
        block = min(n, max(1024, target_block_bytes // itemsize))
        block = max(1024, (block // 1024) * 1024)
        steps = _desired_min_steps(total_bytes)
        if steps > 1:
            cap = max(1024, (pl.cdiv(n, steps) // 1024) * 1024)
            block = min(block, cap)

    grid = (pl.cdiv(n, block),)
    block_bytes = block * itemsize
    vmem_limit = int(min(vmem_ceiling, max(16 * _MiB, 4 * block_bytes + _VMEM_HEADROOM)))

    out_flat = pl.pallas_call(
        _softplus_kernel,
        out_shape=jax.ShapeDtypeStruct((n,), dtype),
        grid=grid,
        in_specs=[pl.BlockSpec((block,), lambda i: (i,))],
        out_specs=pl.BlockSpec((block,), lambda i: (i,)),
        compiler_params=pltpu.CompilerParams(
            dimension_semantics=("parallel",),
            vmem_limit_bytes=vmem_limit,
        ),
        cost_estimate=cost,
    )(x_flat)
    return out_flat.reshape(orig_shape)


if __name__ == "__main__":
    def _ref(v):
        return jnp.log(1.0 + jnp.exp(v))

    # Small NCHW input consistent with the module's elementwise forward.
    x = jax.random.normal(jax.random.PRNGKey(0), (2, 4, 16, 16), dtype=jnp.float32)
    out = softplus_pallas(x)
    jax.block_until_ready(out)
    assert out.shape == x.shape and out.dtype == x.dtype
    assert jnp.allclose(out, _ref(x), atol=1e-5, rtol=1e-5)

    # Ragged (non-multiple-of-128) size: exercises the copy-free 1-D path, single block.
    x2 = jax.random.normal(jax.random.PRNGKey(1), (3, 5, 7), dtype=jnp.float32)
    out2 = softplus_pallas(x2)
    jax.block_until_ready(out2)
    assert out2.shape == x2.shape and out2.dtype == x2.dtype
    assert jnp.allclose(out2, _ref(x2), atol=1e-5, rtol=1e-5)

    # Ragged size > 1024: exercises the masked partial final block in the 1-D path.
    x3 = jax.random.normal(jax.random.PRNGKey(2), (5, 1000), dtype=jnp.float32)
    out3 = softplus_pallas(x3)
    jax.block_until_ready(out3)
    assert jnp.allclose(out3, _ref(x3), atol=1e-5, rtol=1e-5)

    # Moderate aligned tensor (16 MiB): exercises the multi-step grid / megacore cap path.
    x4 = jax.random.normal(jax.random.PRNGKey(3), (1024, 4096), dtype=jnp.float32)
    out4 = softplus_pallas(x4)
    jax.block_until_ready(out4)
    assert jnp.allclose(out4, _ref(x4), atol=1e-5, rtol=1e-5)

    print("KERNEL_OK")
</pallas_src>

<mosaic_0001>
module attributes {stable_mosaic.version = 11 : i64} {
  func.func @_softplus_kernel(%arg0: i32, %arg1: memref<1x2048xf32, #tpu.memory_space<vmem>>, %arg2: memref<1x2048xf32, #tpu.memory_space<vmem>>) attributes {dimension_semantics = [#tpu.dimension_semantics<parallel>], iteration_bounds = array<i64: 1>, scalar_prefetch = 0 : i64, scratch_operands = 0 : i64, tpu.core_type = #tpu.core_type<tc>, window_params = [{transform_indices = @transform_0, window_bounds = array<i64: 1, 2048>}, {transform_indices = @transform_1, window_bounds = array<i64: 1, 2048>}]} {
    %c0 = arith.constant 0 : index
    %c0_0 = arith.constant 0 : index
    %0 = vector.load %arg1[%c0, %c0_0] : memref<1x2048xf32, #tpu.memory_space<vmem>>, vector<1x2048xf32>
    %1 = math.exp %0 : vector<1x2048xf32>
    %cst = arith.constant 1.000000e+00 : f32
    %2 = vector.broadcast %cst : f32 to vector<1x2048xf32>
    %3 = arith.addf %2, %1 : vector<1x2048xf32>
    %4 = math.log %3 : vector<1x2048xf32>
    %c0_1 = arith.constant 0 : index
    %c0_2 = arith.constant 0 : index
    %5 = vector.load %arg2[%c0_1, %c0_2] : memref<1x2048xf32, #tpu.memory_space<vmem>>, vector<1x2048xf32>
    tpu.vector_store %arg2[%c0_1, %c0_2], %4 {strides = array<i32>} : memref<1x2048xf32, #tpu.memory_space<vmem>>, vector<1x2048xf32>,
    return
  }
  func.func @transform_0(%arg0: i32) -> (i32, i32) {
    %c0_i32 = arith.constant 0 : i32
    %c0_i32_0 = arith.constant 0 : i32
    return %arg0, %c0_i32 : i32, i32
  }
  func.func @transform_1(%arg0: i32) -> (i32, i32) {
    %c0_i32 = arith.constant 0 : i32
    %c0_i32_0 = arith.constant 0 : i32
    return %arg0, %c0_i32 : i32, i32
  }
}

</mosaic_0001>

<llo_original>
// kernel: tpu_custom_call.1
$region0: #{tpu_custom_call.1}
  #allocation0 [shape = 'u32[]', space=smem, size = 0x4, offset = 0x4, fixed_abs, tag = 'smem constant byte address 0x4 - core index']
  #allocation1 [shape = 'u32[72,128]{1,0:T(1,128)}', space=vmem, size = 0x9000, scoped, tag = 'internal scratch']
  %s0 = inlined_call_operand.hbm [shape: f32[1,2048], index: 0, kind: input, shape index: {}]
  %s1 = inlined_call_operand.hbm [shape: f32[1,2048], index: 1, kind: output, shape index: {}]
  %s2 = sld [smem:[#allocation0]]
  $region18: #{tpu_custom_call.1} parent=0
    _
  %s4 = ssub.s32 1, %s2
  %s5 = scalar_select 0, %s4, %s2
  $region1: #{tpu_custom_call.1} parent=0
    #allocation2 [shape = 'u8[8192]{0}', space=vmem, size = 0x2000, scoped, tag = 'input window, operand 0, single buffered']
    #allocation3 [shape = 's32[1]{0}', space=sflag, size = 0x4, scoped, tag = 'scoped memory for tpu_custom_call.1']
    #allocation4 [shape = 's32[1]{0}', space=sflag, size = 0x4, scoped, tag = 'scoped memory for tpu_custom_call.1']
    #allocation5 [shape = 'u8[8192]{0}', space=vmem, size = 0x2000, scoped, tag = 'output window, operand 0, single buffered']
    %6 = vsyncpa [#allocation3], 0
    %7 = vsyncpa [#allocation4], 0
    // Predicated region
    $region2: #{tpu_custom_call.1} parent=1 // pred_check
      _
    $region3: #{tpu_custom_call.1} parent=1 // pred_check_branch
      %9 = sbr.rel (0) target = $region5
    $region4: #{tpu_custom_call.1} parent=1 // pred_region
      %11 = vsyncadd [#allocation3], 0
      %s13 = sshll.u32 %s0, 4
      %s14 = int_to_ptr.hbm [resolvable:$true] %s13
      %s15 = sshll.u32 [#allocation2], 4
      %s16 = int_to_ptr.vmem [resolvable:$true] %s15
      %18 = dma.hbm_to_vmem [thread:$0]  %s14, 256, %s16, [#allocation3]
    $region5: #{tpu_custom_call.1} parent=1 // pred_fallthru
      _
    // Predicated region
    $region6: #{tpu_custom_call.1} parent=1 // pred_check
      _
    $region7: #{tpu_custom_call.1} parent=1 // pred_check_branch
      %20 = sbr.rel (0) target = $region9
    $region8: #{tpu_custom_call.1} parent=1 // pred_region
      %22 = dma.done [#allocation3], 256
    $region9: #{tpu_custom_call.1} parent=1 // pred_fallthru
      _
    %v23 = vld [vmem:[#allocation2] sm:$0xff]
    %v24 = vld [vmem:[#allocation2 + $0x8] sm:$0xff]
    %v25 = vmul.f32 %v23, 1.442695
    %v26 = vpow.pop %v25
    %v27 = vmul.f32 %v24, 1.442695
    %v28 = vpow.pop %v27
    %v29 = vadd.f32 %v26, 1.0
    %v30 = vadd.f32 %v28, 1.0
    %v31 = vlog2.pop %v29
    %v32 = vmul.f32 %v31, 0.6931472
    %v33 = vlog2.pop %v30
    %v34 = vmul.f32 %v33, 0.6931472
    %35 = vst [vmem:[#allocation5] sm:$0xff] %v32
    %36 = vst [vmem:[#allocation5 + $0x8] sm:$0xff] %v34
    // Predicated region
    $region10: #{tpu_custom_call.1} parent=1 // pred_check
      _
    $region11: #{tpu_custom_call.1} parent=1 // pred_check_branch
      %38 = sbr.rel (0) target = $region13
    $region12: #{tpu_custom_call.1} parent=1 // pred_region
      %40 = vsyncadd [#allocation4], 0
      %s42 = sshll.u32 [#allocation5], 4
      %s43 = int_to_ptr.vmem [resolvable:$true] %s42
      %s44 = sshll.u32 %s1, 4
      %s45 = int_to_ptr.hbm [resolvable:$true] %s44
      %47 = dma.vmem_to_hbm [thread:$0]  %s43, 256, %s45, [#allocation4]
    $region13: #{tpu_custom_call.1} parent=1 // pred_fallthru
      _
    // Predicated region
    $region14: #{tpu_custom_call.1} parent=1 // pred_check
      _
    $region15: #{tpu_custom_call.1} parent=1 // pred_check_branch
      %49 = sbr.rel (0) target = $region17
    $region16: #{tpu_custom_call.1} parent=1 // pred_region
      %51 = dma.done [#allocation4], 256
    $region17: #{tpu_custom_call.1} parent=1 // pred_fallthru
      _
    %52 = vsyncpa [#allocation3], 1
    %53 = vsyncpa [#allocation4], 1

</llo_original>
